<compile_context>
chip_gen: v7x
topology: tpu7x:2x2x1
jax: 0.10.0
libtpu: 0.0.40
codegen_flags: <defaults>
</compile_context>

<pallas_src>
import math

import jax
import jax.numpy as jnp
from jax.experimental import pallas as pl
from jax.experimental.pallas import tpu as pltpu


def _round_up(x, m):
    return ((x + m - 1) // m) * m


def _const_categorical_kernel(pattern_ref, out_ref):
    # pattern_ref: (1, lane_width) VMEM tile holding `dist` tiled across lanes.
    # out_ref:     (TR, lane_width) VMEM tile of the lane-dense output slab.
    # Scale the tiny pattern once (negligible VPU work), then broadcast across
    # the sublane axis — the bundle is essentially pure unmasked vector stores.
    scaled = pattern_ref[...] * 50.0
    out_ref[...] = jnp.broadcast_to(scaled, out_ref.shape)


def _forward_pallas(batch_size, dist, *, target_block_bytes=2 * 1024 * 1024):
    """Pallas path: dist.repeat(batch_size, 1) * 50.0 -> (B, out_dim) float32."""
    out_dim = dist.shape[0]

    # Lane-dense slab geometry.
    g = math.gcd(out_dim, 128)
    lane_width = out_dim * (128 // g)           # lcm(out_dim, 128): multiple of 128
    rows_per_slab_row = lane_width // out_dim   # batch rows packed per slab row

    slab_rows = -(-batch_size // rows_per_slab_row)              # ceil div
    row_bytes = lane_width * 4
    tr_cap = max(8, (target_block_bytes // row_bytes) // 8 * 8)  # multiple of 8
    tr = min(tr_cap, _round_up(slab_rows, 8))                    # sublane rows / block
    slab_rows_pad = _round_up(slab_rows, tr)
    batch_pad = slab_rows_pad * rows_per_slab_row
    grid = (slab_rows_pad // tr,)

    # dist tiled across one lane-dense slab row (tiny, O(lane_width) work, once).
    pattern = jnp.tile(dist.astype(jnp.float32), rows_per_slab_row).reshape(1, lane_width)

    slab = pl.pallas_call(
        _const_categorical_kernel,
        out_shape=jax.ShapeDtypeStruct((slab_rows_pad, lane_width), jnp.float32),
        grid_spec=pltpu.PrefetchScalarGridSpec(
            num_scalar_prefetch=0,
            grid=grid,
            # Pattern stays resident (same block index for every grid step).
            in_specs=[pl.BlockSpec((1, lane_width), lambda i: (0, 0))],
            # Lane-dense, batch-tiled output -> full 128-lane unmasked stores,
            # double-buffered HBM writeback, VMEM independent of B.
            out_specs=pl.BlockSpec((tr, lane_width), lambda i: (i, 0)),
        ),
        compiler_params=pltpu.CompilerParams(
            dimension_semantics=("parallel",),  # v7x: shard tiles across both TCs
        ),
    )(pattern)

    # Row-major relayout back to (B, out_dim); pad rows are sliced off.
    return slab.reshape(batch_pad, out_dim)[:batch_size]


def policy_net_const_categorical_forward(states, dist, *, min_pallas_batch=1024):
    """Equivalent of PolicyNetConstCategorical.forward(states).

    states: (B, inDim) — only its static batch size is used (matches PyTorch).
    dist:   (outDim,) parameter.
    returns (B, outDim) float32.
    """
    batch_size = states.shape[0]
    out_dim = dist.shape[0]
    if batch_size < min_pallas_batch:
        # Tiny outputs are dominated by pallas_call launch overhead; let XLA
        # fuse the broadcast*scale into neighboring ops instead.
        return jnp.broadcast_to(
            dist.astype(jnp.float32)[None, :] * 50.0, (batch_size, out_dim)
        )
    return _forward_pallas(batch_size, dist)


def init_params(in_dim, out_dim, key):
    """Deterministic parameter init mirroring the PyTorch module's shapes."""
    # dist = nn.Parameter(torch.ones(outDim))
    dist = jnp.ones((out_dim,), dtype=jnp.float32)

    # TODO(synk): Critic(inDim, 100, 1) exists in the module but is never used by
    # forward(); its parameters are created here only to mirror the parameter set.
    mid = 100
    k1, k2, k3 = jax.random.split(key, 3)
    critic = {
        "l1_w": jax.random.normal(k1, (in_dim, mid), jnp.float32) * 0.02,
        "l1_b": jnp.zeros((mid,), jnp.float32),
        "l2_w": jax.random.normal(k2, (mid, mid), jnp.float32) * 0.02,
        "l2_b": jnp.zeros((mid,), jnp.float32),
        "l3_w": jax.random.normal(k3, (mid, 1), jnp.float32) * 0.02,
        "l3_b": jnp.zeros((1,), jnp.float32),
    }
    return dist, critic


if __name__ == "__main__":
    IN_DIM = 16
    OUT_DIM = 8
    BATCH = 4

    key = jax.random.PRNGKey(0)
    k_states, k_params = jax.random.split(key)

    states = jax.random.normal(k_states, (BATCH, IN_DIM), jnp.float32)
    dist, _critic_params = init_params(IN_DIM, OUT_DIM, k_params)

    def ref_out(b):
        return jnp.broadcast_to(dist[None, :] * 50.0, (b, OUT_DIM))

    # 1) Pallas path forced at the module's small shapes (single grid step).
    out_p = jax.block_until_ready(_forward_pallas(BATCH, dist))
    assert out_p.shape == (BATCH, OUT_DIM), out_p.shape
    assert jnp.allclose(out_p, ref_out(BATCH)), (out_p, ref_out(BATCH))

    # 2) Non-aligned batch (exercises slab padding + slice-back).
    B2 = 200
    out_p2 = jax.block_until_ready(_forward_pallas(B2, dist))
    assert out_p2.shape == (B2, OUT_DIM)
    assert jnp.allclose(out_p2, ref_out(B2))

    # 3) Tiny target block -> multi-step batch-tiled grid, still correct.
    out_p3 = jax.block_until_ready(_forward_pallas(B2, dist, target_block_bytes=4096))
    assert out_p3.shape == (B2, OUT_DIM)
    assert jnp.allclose(out_p3, ref_out(B2))

    # 4) Dispatcher: tiny batch routes to plain XLA (Pallas is pure overhead there).
    out_d = jax.block_until_ready(policy_net_const_categorical_forward(states, dist))
    assert out_d.shape == (BATCH, OUT_DIM)
    assert jnp.allclose(out_d, ref_out(BATCH))

    print("KERNEL_OK")
</pallas_src>

<mosaic_0001>
module attributes {stable_mosaic.version = 11 : i64} {
  func.func @_const_categorical_kernel(%arg0: i32, %arg1: memref<1x128xf32, #tpu.memory_space<vmem>>, %arg2: memref<8x128xf32, #tpu.memory_space<vmem>>) attributes {dimension_semantics = [#tpu.dimension_semantics<parallel>], iteration_bounds = array<i64: 1>, scalar_prefetch = 0 : i64, scratch_operands = 0 : i64, tpu.core_type = #tpu.core_type<tc>, window_params = [{pipeline_mode = #tpu.pipeline_mode<synchronous>, transform_indices = @transform_0, window_bounds = array<i64: 1, 128>}, {transform_indices = @transform_1, window_bounds = array<i64: 8, 128>}]} {
    %c0 = arith.constant 0 : index
    %c0_0 = arith.constant 0 : index
    %0 = vector.load %arg1[%c0, %c0_0] : memref<1x128xf32, #tpu.memory_space<vmem>>, vector<1x128xf32>
    %cst = arith.constant 5.000000e+01 : f32
    %1 = vector.broadcast %cst : f32 to vector<1x128xf32>
    %2 = arith.mulf %0, %1 : vector<1x128xf32>
    %3 = vector.shape_cast %2 : vector<1x128xf32> to vector<1x128xf32>
    %4 = vector.broadcast %3 : vector<1x128xf32> to vector<8x128xf32>
    %c0_1 = arith.constant 0 : index
    %c0_2 = arith.constant 0 : index
    %5 = vector.load %arg2[%c0_1, %c0_2] : memref<8x128xf32, #tpu.memory_space<vmem>>, vector<8x128xf32>
    tpu.vector_store %arg2[%c0_1, %c0_2], %4 {strides = array<i32>} : memref<8x128xf32, #tpu.memory_space<vmem>>, vector<8x128xf32>,
    return
  }
  func.func @transform_0(%arg0: i32) -> (i32, i32) {
    %c0_i32 = arith.constant 0 : i32
    %c0_i32_0 = arith.constant 0 : i32
    %c0_i32_1 = arith.constant 0 : i32
    return %c0_i32, %c0_i32_0 : i32, i32
  }
  func.func @transform_1(%arg0: i32) -> (i32, i32) {
    %c0_i32 = arith.constant 0 : i32
    %c0_i32_0 = arith.constant 0 : i32
    return %arg0, %c0_i32 : i32, i32
  }
}

</mosaic_0001>

<llo_original>
// kernel: tpu_custom_call.1
$region0: #{tpu_custom_call.1}
  #allocation0 [shape = 'u32[]', space=smem, size = 0x4, offset = 0x4, fixed_abs, tag = 'smem constant byte address 0x4 - core index']
  #allocation1 [shape = 'u32[144,128]{1,0:T(1,128)}', space=vmem, size = 0x12000, scoped, tag = 'internal scratch']
  %s0 = inlined_call_operand.hbm [shape: f32[1,128], index: 0, kind: input, shape index: {}]
  %s1 = inlined_call_operand.hbm [shape: f32[8,128], index: 1, kind: output, shape index: {}]
  %s2 = sld [smem:[#allocation0]]
  $region18: #{tpu_custom_call.1} parent=0
    _
  %s4 = ssub.s32 1, %s2
  %s5 = scalar_select 0, %s4, %s2
  $region1: #{tpu_custom_call.1} parent=0
    #allocation2 [shape = 'u8[512]{0}', space=vmem, size = 0x400, scoped, tag = 'input window, operand 0, single buffered']
    #allocation3 [shape = 's32[1]{0}', space=sflag, size = 0x4, scoped, tag = 'scoped memory for tpu_custom_call.1']
    #allocation4 [shape = 's32[1]{0}', space=sflag, size = 0x4, scoped, tag = 'scoped memory for tpu_custom_call.1']
    #allocation5 [shape = 'u8[4096]{0}', space=vmem, size = 0x1000, scoped, tag = 'output window, operand 0, single buffered']
    %6 = vsyncpa [#allocation3], 0
    %7 = vsyncpa [#allocation4], 0
    // Predicated region
    $region2: #{tpu_custom_call.1} parent=1 // pred_check
      _
    $region3: #{tpu_custom_call.1} parent=1 // pred_check_branch
      %9 = sbr.rel (0) target = $region5
    $region4: #{tpu_custom_call.1} parent=1 // pred_region
      %s11 = ssub.s32 16, 16
      %12 = vsyncadd [#allocation3], %s11
      %s14 = sshll.u32 [#allocation2], 4
      %s15 = int_to_ptr.vmem [resolvable:$true] %s14
      %17 = dma.hbm_to_vmem [thread:$0]  %s0, 16, %s15, [#allocation3]
    $region5: #{tpu_custom_call.1} parent=1 // pred_fallthru
      _
    // Predicated region
    $region6: #{tpu_custom_call.1} parent=1 // pred_check
      _
    $region7: #{tpu_custom_call.1} parent=1 // pred_check_branch
      %19 = sbr.rel (0) target = $region9
    $region8: #{tpu_custom_call.1} parent=1 // pred_region
      %20 = dma.done [#allocation3], 16
    $region9: #{tpu_custom_call.1} parent=1 // pred_fallthru
      _
    %v21 = vld [vmem:[#allocation2] sm:$0x1]
    %v22 = vmul.f32 %v21, 50.0
    %v24 = vlaneseq
    %v25 = vshrl.u32 %v24, 7
    %v26 = vsub.s32 0, %v25
    %v27 = vrot.slane %v22, %v26
    %29 = vst [vmem:[#allocation5] sm:$0xff] %v27
    // Predicated region
    $region10: #{tpu_custom_call.1} parent=1 // pred_check
      _
    $region11: #{tpu_custom_call.1} parent=1 // pred_check_branch
      %31 = sbr.rel (0) target = $region13
    $region12: #{tpu_custom_call.1} parent=1 // pred_region
      %s33 = ssub.s32 128, 128
      %34 = vsyncadd [#allocation4], %s33
      %s36 = sshll.u32 [#allocation5], 4
      %s37 = int_to_ptr.vmem [resolvable:$true] %s36
      %39 = dma.vmem_to_hbm [thread:$0]  %s37, 128, %s1, [#allocation4]
    $region13: #{tpu_custom_call.1} parent=1 // pred_fallthru
      _
    // Predicated region
    $region14: #{tpu_custom_call.1} parent=1 // pred_check
      _
    $region15: #{tpu_custom_call.1} parent=1 // pred_check_branch
      %41 = sbr.rel (0) target = $region17
    $region16: #{tpu_custom_call.1} parent=1 // pred_region
      %42 = dma.done [#allocation4], 128
    $region17: #{tpu_custom_call.1} parent=1 // pred_fallthru
      _
    %43 = vsyncpa [#allocation3], 1
    %44 = vsyncpa [#allocation4], 1

</llo_original>
